<compile_context>
chip_gen: v5e
topology: v5e:2x2
jax: 0.10.0
libtpu: 0.0.40
codegen_flags: <defaults>
</compile_context>

<pallas_src>
import functools

import jax
import jax.numpy as jnp
from jax import lax
from jax.experimental import pallas as pl
from jax.experimental.pallas import tpu as pltpu


# --------------------------------------------------------------------------
# Kernel 1: tiled cosine-distance + hard example mining.
# --------------------------------------------------------------------------
def _mine_kernel(row_ref, col_ref, t_col_ref, t_row_ref,
                 ap_out_ref, an_out_ref, ap_scr, an_scr,
                 *, tn, n_real, mask_cols):
    j = pl.program_id(1)

    @pl.when(j == 0)
    def _():
        ap_scr[...] = jnp.full(ap_scr.shape, -jnp.inf, jnp.float32)
        an_scr[...] = jnp.full(an_scr.shape, jnp.inf, jnp.float32)

    # --- L2 normalize the anchor-row tile and the candidate-column tile ---
    xi = row_ref[...].astype(jnp.float32)                       # [TM, Dp]
    xj = col_ref[...].astype(jnp.float32)                       # [TN, Dp]
    inv_ni = pl.reciprocal(
        jnp.sqrt(jnp.sum(xi * xi, axis=1, keepdims=True)) + 1e-12, approx=True)
    inv_nj = pl.reciprocal(
        jnp.sqrt(jnp.sum(xj * xj, axis=1, keepdims=True)) + 1e-12, approx=True)
    xi_n = (xi * inv_ni).astype(jnp.bfloat16)
    xj_n = (xj * inv_nj).astype(jnp.bfloat16)

    # --- cosine distance tile: 2 - 2 * xi_n @ xj_n.T (bf16 MXU, f32 acc) ---
    sim = lax.dot_general(xi_n, xj_n, (((1,), (1,)), ((), ())),
                          preferred_element_type=jnp.float32)   # [TM, TN]
    dist = 2.0 - 2.0 * sim

    # --- masks via bool compare + select (no f32 pos/neg tensors) ---
    pos = t_col_ref[...] == t_row_ref[...]                      # [TM, TN] bool
    if mask_cols:
        col_ids = j * tn + lax.broadcasted_iota(jnp.int32, (1, tn), 1)
        col_valid = col_ids < n_real                            # [1, TN]
        pos_max = jnp.logical_and(pos, col_valid)               # for the max
        excl_min = jnp.logical_or(pos, jnp.logical_not(col_valid))
    else:
        pos_max = pos
        excl_min = pos

    ap_tile = jnp.max(jnp.where(pos_max, dist, 0.0), axis=1, keepdims=True)
    an_tile = jnp.min(jnp.where(excl_min, 99999999.0, dist), axis=1,
                      keepdims=True)

    ap_scr[...] = jnp.maximum(ap_scr[...], ap_tile)
    an_scr[...] = jnp.minimum(an_scr[...], an_tile)

    @pl.when(j == pl.num_programs(1) - 1)
    def _():
        ap_out_ref[...] = ap_scr[...]
        an_out_ref[...] = an_scr[...]


# --------------------------------------------------------------------------
# Kernel 2: soft-margin loss (+ Inf fallback) reduction over [N, 1] vectors.
# --------------------------------------------------------------------------
def _loss_kernel(ap_ref, an_ref, loss_ref, *, n_real, mask_rows):
    ap = ap_ref[...]                                            # [Np, 1]
    an = an_ref[...]
    diff = an - ap
    # NOTE: keep the naive log1p(exp(-diff)) so the overflow-to-inf fallback
    # branch triggers exactly like the PyTorch reference.
    soft_terms = jnp.log1p(jnp.exp(-diff))
    fb_terms = jnp.maximum(ap - an + 0.3, 0.0)
    if mask_rows:
        rows = lax.broadcasted_iota(jnp.int32, ap.shape, 0)
        valid = rows < n_real
        soft_terms = jnp.where(valid, soft_terms, 0.0)
        fb_terms = jnp.where(valid, fb_terms, 0.0)
    soft = jnp.sum(soft_terms) / n_real
    fallback = jnp.sum(fb_terms) / n_real
    loss_ref[...] = jnp.reshape(jnp.where(jnp.isinf(soft), fallback, soft),
                                (1, 1))


# --------------------------------------------------------------------------
# Wrapper
# --------------------------------------------------------------------------
def _round_up(x, m):
    return ((x + m - 1) // m) * m


def triplet_loss(embedding, targets, *, tile=256):
    """embedding: [N, D] float, targets: [N] int -> scalar float32 loss."""
    n, d = embedding.shape

    # Lane-dense feature dim (multiple of 128); zeros are free for norm & dot.
    d_pad = _round_up(max(d, 128), 128)
    if n <= tile:
        n_pad = _round_up(n, 8)
        tm = tn = n_pad
    else:
        tm = tn = tile
        n_pad = _round_up(n, tile)

    emb = embedding
    if (n_pad, d_pad) != (n, d):
        emb = jnp.pad(embedding, ((0, n_pad - n), (0, d_pad - d)))

    t = targets.astype(jnp.int32)
    if n_pad != n:
        t = jnp.pad(t, (0, n_pad - n))
    t_col = t.reshape(n_pad, 1)
    t_row = t.reshape(1, n_pad)

    grid = (n_pad // tm, n_pad // tn)
    mine = functools.partial(_mine_kernel, tn=tn, n_real=n,
                             mask_cols=(n_pad != n))

    ap, an = pl.pallas_call(
        mine,
        out_shape=(jax.ShapeDtypeStruct((n_pad, 1), jnp.float32),
                   jax.ShapeDtypeStruct((n_pad, 1), jnp.float32)),
        grid=grid,
        in_specs=[
            pl.BlockSpec((tm, d_pad), lambda i, j: (i, 0)),   # anchor rows
            pl.BlockSpec((tn, d_pad), lambda i, j: (j, 0)),   # candidate cols
            pl.BlockSpec((tm, 1), lambda i, j: (i, 0)),       # targets (col)
            pl.BlockSpec((1, tn), lambda i, j: (0, j)),       # targets (row)
        ],
        out_specs=(pl.BlockSpec((tm, 1), lambda i, j: (i, 0)),
                   pl.BlockSpec((tm, 1), lambda i, j: (i, 0))),
        scratch_shapes=[pltpu.VMEM((tm, 1), jnp.float32),     # running max ap
                        pltpu.VMEM((tm, 1), jnp.float32)],    # running min an
        compiler_params=pltpu.CompilerParams(
            dimension_semantics=("parallel", "arbitrary"),
            vmem_limit_bytes=32 * 1024 * 1024),
    )(emb, emb, t_col, t_row)

    reduce_kernel = functools.partial(_loss_kernel, n_real=n,
                                      mask_rows=(n_pad != n))
    loss = pl.pallas_call(
        reduce_kernel,
        out_shape=jax.ShapeDtypeStruct((1, 1), jnp.float32),
        in_specs=[pl.BlockSpec((n_pad, 1), lambda: (0, 0)),
                  pl.BlockSpec((n_pad, 1), lambda: (0, 0))],
        out_specs=pl.BlockSpec((1, 1), lambda: (0, 0)),
    )(ap, an)
    return loss[0, 0]


# --------------------------------------------------------------------------
# Pure-JAX reference (matches the PyTorch module, f32).
# --------------------------------------------------------------------------
def _triplet_loss_ref(embedding, targets):
    x = embedding.astype(jnp.float32)
    xn = x / (jnp.linalg.norm(x, axis=1, keepdims=True) + 1e-12)
    dist = 2.0 - 2.0 * xn @ xn.T
    t = targets.astype(jnp.int32)
    pos = (t[:, None] == t[None, :]).astype(jnp.float32)
    neg = 1.0 - pos
    dist_ap = jnp.max(dist * pos, axis=1)
    dist_an = jnp.min(dist * neg + pos * 99999999.0, axis=1)
    soft = jnp.mean(jnp.log1p(jnp.exp(-(dist_an - dist_ap))))
    fallback = jnp.mean(jnp.maximum(dist_ap - dist_an + 0.3, 0.0))
    return jnp.where(jnp.isinf(soft), fallback, soft)


if __name__ == "__main__":
    key = jax.random.PRNGKey(0)
    k_emb, k_emb2, k_tgt2 = jax.random.split(key, 3)

    # Small test: N=8 samples (4 classes x 2), feature dim D=32 (single tile).
    N, D = 8, 32
    embedding = jax.random.normal(k_emb, (N, D), dtype=jnp.float32)
    targets = jnp.array([0, 0, 1, 1, 2, 2, 3, 3], dtype=jnp.int32)

    loss = triplet_loss(embedding, targets)
    jax.block_until_ready(loss)
    ref = _triplet_loss_ref(embedding, targets)
    # bf16 MXU inputs + approx reciprocal => moderate tolerance vs f32 ref.
    assert jnp.allclose(loss, ref, rtol=5e-2, atol=5e-2), (loss, ref)

    # Second test exercising the tiled/padded/masked path: grid 3x3.
    N2, D2 = 300, 96
    emb2 = jax.random.normal(k_emb2, (N2, D2), dtype=jnp.float32)
    tgt2 = jax.random.randint(k_tgt2, (N2,), 0, 10, dtype=jnp.int32)
    loss2 = triplet_loss(emb2, tgt2, tile=128)
    jax.block_until_ready(loss2)
    ref2 = _triplet_loss_ref(emb2, tgt2)
    assert jnp.allclose(loss2, ref2, rtol=5e-2, atol=5e-2), (loss2, ref2)

    print("KERNEL_OK")
</pallas_src>

<mosaic_0001>
module attributes {stable_mosaic.version = 11 : i64} {
  func.func @_mine_kernel(%arg0: i32, %arg1: i32, %arg2: memref<8x128xf32, #tpu.memory_space<vmem>>, %arg3: memref<8x128xf32, #tpu.memory_space<vmem>>, %arg4: memref<8x1xi32, #tpu.memory_space<vmem>>, %arg5: memref<1x8xi32, #tpu.memory_space<vmem>>, %arg6: memref<8x1xf32, #tpu.memory_space<vmem>>, %arg7: memref<8x1xf32, #tpu.memory_space<vmem>>, %arg8: memref<8x1xf32, #tpu.memory_space<vmem>>, %arg9: memref<8x1xf32, #tpu.memory_space<vmem>>) attributes {dimension_semantics = [#tpu.dimension_semantics<parallel>, #tpu.dimension_semantics<arbitrary>], iteration_bounds = array<i64: 1, 1>, scalar_prefetch = 0 : i64, scratch_operands = 2 : i64, tpu.core_type = #tpu.core_type<tc>, window_params = [{transform_indices = @transform_0, window_bounds = array<i64: 8, 128>}, {transform_indices = @transform_1, window_bounds = array<i64: 8, 128>}, {transform_indices = @transform_2, window_bounds = array<i64: 8, 1>}, {transform_indices = @transform_3, window_bounds = array<i64: 1, 8>}, {transform_indices = @transform_4, window_bounds = array<i64: 8, 1>}, {transform_indices = @transform_5, window_bounds = array<i64: 8, 1>}]} {
    %c0_i32 = arith.constant 0 : i32
    %0 = arith.cmpi eq, %arg1, %c0_i32 : i32
    %1 = arith.extui %0 : i1 to i32
    %c0_i32_0 = arith.constant 0 : i32
    %2 = arith.cmpi ne, %1, %c0_i32_0 : i32
    scf.if %2 {
      %cst_28 = arith.constant 0xFF800000 : f32
      %52 = vector.broadcast %cst_28 : f32 to vector<8x1xf32>
      %c0_29 = arith.constant 0 : index
      %c0_30 = arith.constant 0 : index
      %53 = vector.load %arg8[%c0_29, %c0_30] : memref<8x1xf32, #tpu.memory_space<vmem>>, vector<8x1xf32>
      tpu.vector_store %arg8[%c0_29, %c0_30], %52 {strides = array<i32>} : memref<8x1xf32, #tpu.memory_space<vmem>>, vector<8x1xf32>,
      %cst_31 = arith.constant 0x7F800000 : f32
      %54 = vector.broadcast %cst_31 : f32 to vector<8x1xf32>
      %c0_32 = arith.constant 0 : index
      %c0_33 = arith.constant 0 : index
      %55 = vector.load %arg9[%c0_32, %c0_33] : memref<8x1xf32, #tpu.memory_space<vmem>>, vector<8x1xf32>
      tpu.vector_store %arg9[%c0_32, %c0_33], %54 {strides = array<i32>} : memref<8x1xf32, #tpu.memory_space<vmem>>, vector<8x1xf32>,
    } else {
    }
    %c0 = arith.constant 0 : index
    %c0_1 = arith.constant 0 : index
    %3 = vector.load %arg2[%c0, %c0_1] : memref<8x128xf32, #tpu.memory_space<vmem>>, vector<8x128xf32>
    %c0_2 = arith.constant 0 : index
    %c0_3 = arith.constant 0 : index
    %4 = vector.load %arg3[%c0_2, %c0_3] : memref<8x128xf32, #tpu.memory_space<vmem>>, vector<8x128xf32>
    %5 = arith.mulf %3, %3 : vector<8x128xf32>
    %cst = arith.constant dense<0.000000e+00> : vector<8xf32>
    %6 = vector.multi_reduction <add>, %5, %cst [1] : vector<8x128xf32> to vector<8xf32>
    %7 = vector.shape_cast %6 : vector<8xf32> to vector<8x1xf32>
    %8 = math.sqrt %7 : vector<8x1xf32>
    %cst_4 = arith.constant 9.99999996E-13 : f32
    %9 = vector.broadcast %cst_4 : f32 to vector<8x1xf32>
    %10 = arith.addf %8, %9 : vector<8x1xf32>
    %11 = tpu.reciprocal %10 {approx = true} : vector<8x1xf32> -> vector<8x1xf32>
    %12 = arith.mulf %4, %4 : vector<8x128xf32>
    %cst_5 = arith.constant dense<0.000000e+00> : vector<8xf32>
    %13 = vector.multi_reduction <add>, %12, %cst_5 [1] : vector<8x128xf32> to vector<8xf32>
    %14 = vector.shape_cast %13 : vector<8xf32> to vector<8x1xf32>
    %15 = math.sqrt %14 : vector<8x1xf32>
    %cst_6 = arith.constant 9.99999996E-13 : f32
    %16 = vector.broadcast %cst_6 : f32 to vector<8x1xf32>
    %17 = arith.addf %15, %16 : vector<8x1xf32>
    %18 = tpu.reciprocal %17 {approx = true} : vector<8x1xf32> -> vector<8x1xf32>
    %19 = vector.broadcast %11 : vector<8x1xf32> to vector<8x128xf32>
    %20 = arith.mulf %3, %19 : vector<8x128xf32>
    %21 = arith.truncf %20 : vector<8x128xf32> to vector<8x128xbf16>
    %22 = vector.broadcast %18 : vector<8x1xf32> to vector<8x128xf32>
    %23 = arith.mulf %4, %22 : vector<8x128xf32>
    %24 = arith.truncf %23 : vector<8x128xf32> to vector<8x128xbf16>
    %cst_7 = arith.constant dense<0.000000e+00> : vector<8x8xf32>
    %25 = tpu.matmul %21, %24, %cst_7 {dimension_numbers = #tpu.dot_dimension_numbers<[1], [1], [0], [0], [0, 0, 1, 0], [], []>} : vector<8x128xbf16>, vector<8x128xbf16>, vector<8x8xf32> -> vector<8x8xf32>
    %cst_8 = arith.constant 2.000000e+00 : f32
    %26 = vector.broadcast %cst_8 : f32 to vector<8x8xf32>
    %27 = arith.mulf %26, %25 : vector<8x8xf32>
    %cst_9 = arith.constant 2.000000e+00 : f32
    %28 = vector.broadcast %cst_9 : f32 to vector<8x8xf32>
    %29 = arith.subf %28, %27 : vector<8x8xf32>
    %c0_10 = arith.constant 0 : index
    %c0_11 = arith.constant 0 : index
    %30 = vector.load %arg4[%c0_10, %c0_11] : memref<8x1xi32, #tpu.memory_space<vmem>>, vector<8x1xi32>
    %c0_12 = arith.constant 0 : index
    %c0_13 = arith.constant 0 : index
    %31 = vector.load %arg5[%c0_12, %c0_13] : memref<1x8xi32, #tpu.memory_space<vmem>>, vector<1x8xi32>
    %32 = vector.broadcast %30 : vector<8x1xi32> to vector<8x8xi32>
    %33 = vector.broadcast %31 : vector<1x8xi32> to vector<8x8xi32>
    %34 = arith.cmpi eq, %32, %33 : vector<8x8xi32>
    %cst_14 = arith.constant 0.000000e+00 : f32
    %35 = vector.broadcast %cst_14 : f32 to vector<8x8xf32>
    %36 = arith.select %34, %29, %35 : vector<8x8xi1>, vector<8x8xf32>
    %cst_15 = arith.constant dense<0xFF800000> : vector<8xf32>
    %37 = vector.multi_reduction <maximumf>, %36, %cst_15 [1] : vector<8x8xf32> to vector<8xf32>
    %38 = vector.shape_cast %37 : vector<8xf32> to vector<8x1xf32>
    %cst_16 = arith.constant 1.000000e+08 : f32
    %39 = vector.broadcast %cst_16 : f32 to vector<8x8xf32>
    %40 = arith.select %34, %39, %29 : vector<8x8xi1>, vector<8x8xf32>
    %cst_17 = arith.constant dense<0x7F800000> : vector<8xf32>
    %41 = vector.multi_reduction <minimumf>, %40, %cst_17 [1] : vector<8x8xf32> to vector<8xf32>
    %42 = vector.shape_cast %41 : vector<8xf32> to vector<8x1xf32>
    %c0_18 = arith.constant 0 : index
    %c0_19 = arith.constant 0 : index
    %43 = vector.load %arg8[%c0_18, %c0_19] : memref<8x1xf32, #tpu.memory_space<vmem>>, vector<8x1xf32>
    %44 = arith.maximumf %43, %38 : vector<8x1xf32>
    %c0_20 = arith.constant 0 : index
    %c0_21 = arith.constant 0 : index
    %45 = vector.load %arg8[%c0_20, %c0_21] : memref<8x1xf32, #tpu.memory_space<vmem>>, vector<8x1xf32>
    tpu.vector_store %arg8[%c0_20, %c0_21], %44 {strides = array<i32>} : memref<8x1xf32, #tpu.memory_space<vmem>>, vector<8x1xf32>,
    %c0_22 = arith.constant 0 : index
    %c0_23 = arith.constant 0 : index
    %46 = vector.load %arg9[%c0_22, %c0_23] : memref<8x1xf32, #tpu.memory_space<vmem>>, vector<8x1xf32>
    %47 = arith.minimumf %46, %42 : vector<8x1xf32>
    %c0_24 = arith.constant 0 : index
    %c0_25 = arith.constant 0 : index
    %48 = vector.load %arg9[%c0_24, %c0_25] : memref<8x1xf32, #tpu.memory_space<vmem>>, vector<8x1xf32>
    tpu.vector_store %arg9[%c0_24, %c0_25], %47 {strides = array<i32>} : memref<8x1xf32, #tpu.memory_space<vmem>>, vector<8x1xf32>,
    %c0_i32_26 = arith.constant 0 : i32
    %49 = arith.cmpi eq, %arg1, %c0_i32_26 : i32
    %50 = arith.extui %49 : i1 to i32
    %c0_i32_27 = arith.constant 0 : i32
    %51 = arith.cmpi ne, %50, %c0_i32_27 : i32
    scf.if %51 {
      %c0_28 = arith.constant 0 : index
      %c0_29 = arith.constant 0 : index
      %52 = vector.load %arg8[%c0_28, %c0_29] : memref<8x1xf32, #tpu.memory_space<vmem>>, vector<8x1xf32>
      %c0_30 = arith.constant 0 : index
      %c0_31 = arith.constant 0 : index
      %53 = vector.load %arg6[%c0_30, %c0_31] : memref<8x1xf32, #tpu.memory_space<vmem>>, vector<8x1xf32>
      tpu.vector_store %arg6[%c0_30, %c0_31], %52 {strides = array<i32>} : memref<8x1xf32, #tpu.memory_space<vmem>>, vector<8x1xf32>,
      %c0_32 = arith.constant 0 : index
      %c0_33 = arith.constant 0 : index
      %54 = vector.load %arg9[%c0_32, %c0_33] : memref<8x1xf32, #tpu.memory_space<vmem>>, vector<8x1xf32>
      %c0_34 = arith.constant 0 : index
      %c0_35 = arith.constant 0 : index
      %55 = vector.load %arg7[%c0_34, %c0_35] : memref<8x1xf32, #tpu.memory_space<vmem>>, vector<8x1xf32>
      tpu.vector_store %arg7[%c0_34, %c0_35], %54 {strides = array<i32>} : memref<8x1xf32, #tpu.memory_space<vmem>>, vector<8x1xf32>,
    } else {
    }
    return
  }
  func.func @transform_0(%arg0: i32, %arg1: i32) -> (i32, i32) {
    %c0_i32 = arith.constant 0 : i32
    %c0_i32_0 = arith.constant 0 : i32
    return %arg0, %c0_i32 : i32, i32
  }
  func.func @transform_1(%arg0: i32, %arg1: i32) -> (i32, i32) {
    %c0_i32 = arith.constant 0 : i32
    %c0_i32_0 = arith.constant 0 : i32
    return %arg1, %c0_i32 : i32, i32
  }
  func.func @transform_2(%arg0: i32, %arg1: i32) -> (i32, i32) {
    %c0_i32 = arith.constant 0 : i32
    %c0_i32_0 = arith.constant 0 : i32
    return %arg0, %c0_i32 : i32, i32
  }
  func.func @transform_3(%arg0: i32, %arg1: i32) -> (i32, i32) {
    %c0_i32 = arith.constant 0 : i32
    %c0_i32_0 = arith.constant 0 : i32
    return %c0_i32, %arg1 : i32, i32
  }
  func.func @transform_4(%arg0: i32, %arg1: i32) -> (i32, i32) {
    %c0_i32 = arith.constant 0 : i32
    %c0_i32_0 = arith.constant 0 : i32
    return %arg0, %c0_i32 : i32, i32
  }
  func.func @transform_5(%arg0: i32, %arg1: i32) -> (i32, i32) {
    %c0_i32 = arith.constant 0 : i32
    %c0_i32_0 = arith.constant 0 : i32
    return %arg0, %c0_i32 : i32, i32
  }
}

</mosaic_0001>

<llo_original>
// kernel: tpu_custom_call.1
$region0: #{tpu_custom_call.1}
  #allocation0 [shape = 'u32[]', space=smem, size = 0x4, offset = 0x4, fixed_abs, tag = 'smem constant byte address 0x4 - core index']
  #allocation1 [shape = 'u32[72,128]{1,0:T(1,128)}', space=vmem, size = 0x9000, scoped, tag = 'internal scratch']
  #allocation2 [shape = 'f32[8,1]{1,0:T(8,128)}', space=vmem, size = 0x1000, scoped, tag = 'scratch operand']
  #allocation3 [shape = 'f32[8,1]{1,0:T(8,128)}', space=vmem, size = 0x1000, scoped, tag = 'scratch operand']
  %s0 = inlined_call_operand.vmem [shape: f32[8,128], index: 0, kind: input, shape index: {}]
  %s1 = inlined_call_operand.hbm [shape: f32[8,128], index: 1, kind: input, shape index: {}]
  %s2 = inlined_call_operand.vmem [shape: s32[8,1], index: 2, kind: input, shape index: {}]
  %s3 = inlined_call_operand.vmem [shape: s32[1,8], index: 3, kind: input, shape index: {}]
  %s4 = inlined_call_operand.vmem [shape: f32[8,1], index: 4, kind: output, shape index: {0}]
  %s5 = inlined_call_operand.vmem [shape: f32[8,1], index: 5, kind: output, shape index: {1}]
  %6 = xla_tuple %s4, %s5
  %s7 = sld [smem:[#allocation0]]
  $region46: #{tpu_custom_call.1} parent=0
    _
  %s9 = ssub.s32 1, %s7
  %s10 = scalar_select 0, %s9, %s7
  $region1: #{tpu_custom_call.1} parent=0
    #allocation4 [shape = 'u8[4096]{0}', space=vmem, size = 0x1000, scoped, tag = 'input window, operand 1, single buffered']
    #allocation5 [shape = 's32[1]{0}', space=sflag, size = 0x4, scoped, tag = 'scoped memory for tpu_custom_call.1']
    %11 = vsyncpa [#allocation5], 0
    // Predicated region
    $region2: #{tpu_custom_call.1} parent=1 // pred_check
      _
    $region3: #{tpu_custom_call.1} parent=1 // pred_check_branch
      %13 = sbr.rel (0) target = $region5
    $region4: #{tpu_custom_call.1} parent=1 // pred_region
      _
    $region5: #{tpu_custom_call.1} parent=1 // pred_fallthru
      _
    // Predicated region
    $region6: #{tpu_custom_call.1} parent=1 // pred_check
      _
    $region7: #{tpu_custom_call.1} parent=1 // pred_check_branch
      %15 = sbr.rel (0) target = $region9
    $region8: #{tpu_custom_call.1} parent=1 // pred_region
      %17 = vsyncadd [#allocation5], 0
      %s19 = sshll.u32 %s1, 4
      %s20 = int_to_ptr.hbm [resolvable:$true] %s19
      %s21 = sshll.u32 [#allocation4], 4
      %s22 = int_to_ptr.vmem [resolvable:$true] %s21
      %24 = dma.hbm_to_vmem [thread:$0]  %s20, 128, %s22, [#allocation5]
    $region9: #{tpu_custom_call.1} parent=1 // pred_fallthru
      _
    // Predicated region
    $region10: #{tpu_custom_call.1} parent=1 // pred_check
      _
    $region11: #{tpu_custom_call.1} parent=1 // pred_check_branch
      %26 = sbr.rel (0) target = $region13
    $region12: #{tpu_custom_call.1} parent=1 // pred_region
      _
    $region13: #{tpu_custom_call.1} parent=1 // pred_fallthru
      _
    // Predicated region
    $region14: #{tpu_custom_call.1} parent=1 // pred_check
      _
    $region15: #{tpu_custom_call.1} parent=1 // pred_check_branch
      %28 = sbr.rel (0) target = $region17
    $region16: #{tpu_custom_call.1} parent=1 // pred_region
      _
    $region17: #{tpu_custom_call.1} parent=1 // pred_fallthru
      _
    // Predicated region
    $region18: #{tpu_custom_call.1} parent=1 // pred_check
      _
    $region19: #{tpu_custom_call.1} parent=1 // pred_check_branch
      %30 = sbr.rel (0) target = $region21
    $region20: #{tpu_custom_call.1} parent=1 // pred_region
      %32 = dma.done [#allocation5], 128
    $region21: #{tpu_custom_call.1} parent=1 // pred_fallthru
      _
    %p34 = scmp.eq.s32.totalorder 0, 0
    // Predicated region
    $region22: #{tpu_custom_call.1} parent=1 // pred_check
      %p35 = pneg %p34
    $region23: #{tpu_custom_call.1} parent=1 // pred_check_branch
      %37 = sbr.rel (%p35) target = $region25
    $region24: #{tpu_custom_call.1} parent=1 // pred_region
      %vm38 = vcmask 7168
      %39 = vst.msk [vmem:[#allocation2] sm:$0xff] %vm38, -inf
      %40 = vst.msk [vmem:[#allocation3] sm:$0xff] %vm38, inf
    $region25: #{tpu_custom_call.1} parent=1 // pred_fallthru
      _
    %v41 = vld [vmem:[%s0] sm:$0xff]
    %v42 = vld [vmem:[#allocation4] sm:$0xff]
    %v43 = vmul.f32 %v41, %v41
    %44 = vadd.xlane.f32.xlu0 %v43
    %v45 = vpop.xlane.xlu0 %44
    %v46 = vrsqrt.pop %v45
    %v47 = vmul.f32 %v46, %v45
    %v48 = vmul.f32 %v47, %v46
    %v49 = vmul.f32 0.5, %v48
    %v50 = vsub.f32 1.5, %v49
    %v51 = vmul.f32 %v46, %v50
    %v52 = vmul.f32 %v45, %v51
    %vm53 = vcmp.eq.f32.partialorder %v45, inf
    %v54 = vsel %vm53, %v45, %v52
    %vm55 = vcmp.eq.f32.partialorder %v45, 0.0
    %v56 = vand.u32 %v45, 2147483648
    %v57 = vsel %vm55, %v56, %v54
    %v58 = vadd.f32 %v57, 1e-12
    %v59 = vrcp.pop %v58
    %v60 = vmul.f32 %v42, %v42
    %61 = vadd.xlane.f32.xlu0 %v60
    %v62 = vpop.xlane.xlu0 %61
    %v63 = vrsqrt.pop %v62
    %v64 = vmul.f32 %v63, %v62
    %v65 = vmul.f32 %v64, %v63
    %v66 = vmul.f32 0.5, %v65
    %v67 = vsub.f32 1.5, %v66
    %v68 = vmul.f32 %v63, %v67
    %v69 = vmul.f32 %v62, %v68
    %vm70 = vcmp.eq.f32.partialorder %v62, inf
    %v71 = vsel %vm70, %v62, %v69
    %vm72 = vcmp.eq.f32.partialorder %v62, 0.0
    %v73 = vand.u32 %v62, 2147483648
    %v74 = vsel %vm72, %v73, %v71
    %v75 = vadd.f32 %v74, 1e-12
    %v76 = vrcp.pop %v75
    %v77 = vmul.f32 %v41, %v59
    %v78 = vpack.c.bf16 %v77, %v77
    %v79 = vmul.f32 %v42, %v76
    %v80 = vpack.c.bf16 %v79, %v79
    %81 = vmatpush.bf16.xpose.msra.mxu0 0
    %82 = vmatpush.bf16.xpose.msra.mxu0 0
    %83 = vmatpush.bf16.xpose.msra.mxu0 0
    %84 = vmatpush.bf16.xpose.msra.mxu0 0
    %85 = vmatpush.bf16.xpose.msra.mxu0 0
    %86 = vmatpush.bf16.xpose.msra.mxu0 0
    %87 = vmatpush.bf16.xpose.msra.mxu0 0
    %88 = vmatpush.bf16.xpose.msra.mxu0 %v80
    %89 = vmatmul.bf16.gmra.mxu0 %v78
    %v90 = vpop.f32.mrf.mxu0
    %v91 = vadd.f32 0.0, %v90
    %v92 = vpop.f32.mrf.mxu0
    %93 = vdwg.mxu0
    %v94 = vmul.f32 %v91, 2.0
    %v95 = vsub.f32 2.0, %v94
    %v96 = vld [vmem:[%s2] sm:$0xff]
    %v97 = vld [vmem:[%s3] sm:$0x1]
    %98 = vset.pattern.permute.xlu0 0
    %99 = vperm.xlu0 %98, %v96
    %v100 = vpop.permute.xlu0 %99
    %v101 = vperm.slane %v97, 0
    %vm102 = vcmp.eq.s32.totalorder %v100, %v101
    %v103 = vsel %vm102, %v95, 0.0
    %vm104 = vcmask 64512
    %v105 = vsel %vm104, %v103, -inf
    %106 = vmax.xlane.f32.xlu0 %v105
    %v107 = vpop.xlane.xlu0 %106
    %v108 = vsel %vm102, 1e+08, %v95
    %v109 = vsel %vm104, %v108, inf
    %110 = vmin.xlane.f32.xlu0 %v109
    %v111 = vpop.xlane.xlu0 %110
    %v112 = vld [vmem:[#allocation2] sm:$0xff]
    %v113 = vmax.f32 %v112, %v107
    %vm114 = vcmask 7168
    %115 = vst.msk [vmem:[#allocation2] sm:$0xff] %vm114, %v113
    %v116 = vld [vmem:[#allocation3] sm:$0xff]
    %v117 = vmin.f32 %v116, %v111
    %118 = vst.msk [vmem:[#allocation3] sm:$0xff] %vm114, %v117
    // Predicated region
    $region26: #{tpu_custom_call.1} parent=1 // pred_check
      %p119 = pneg %p34
    $region27: #{tpu_custom_call.1} parent=1 // pred_check_branch
      %121 = sbr.rel (%p119) target = $region29
    $region28: #{tpu_custom_call.1} parent=1 // pred_region
      %v122 = vld [vmem:[#allocation2] sm:$0xff]
      %123 = vst.msk [vmem:[%s4] sm:$0xff] %vm114, %v122
      %v124 = vld [vmem:[#allocation3] sm:$0xff]
      %125 = vst.msk [vmem:[%s5] sm:$0xff] %vm114, %v124
    $region29: #{tpu_custom_call.1} parent=1 // pred_fallthru
      _
    // Predicated region
    $region30: #{tpu_custom_call.1} parent=1 // pred_check
      _
    $region31: #{tpu_custom_call.1} parent=1 // pred_check_branch
      %127 = sbr.rel (0) target = $region33
    $region32: #{tpu_custom_call.1} parent=1 // pred_region
      _
    $region33: #{tpu_custom_call.1} parent=1 // pred_fallthru
      _
    // Predicated region
    $region34: #{tpu_custom_call.1} parent=1 // pred_check
      _
    $region35: #{tpu_custom_call.1} parent=1 // pred_check_branch
      %129 = sbr.rel (0) target = $region37
    $region36: #{tpu_custom_call.1} parent=1 // pred_region
      _
    $region37: #{tpu_custom_call.1} parent=1 // pred_fallthru
      _
    // Predicated region
    $region38: #{tpu_custom_call.1} parent=1 // pred_check
      _
    $region39: #{tpu_custom_call.1} parent=1 // pred_check_branch
      %131 = sbr.rel (0) target = $region41
    $region40: #{tpu_custom_call.1} parent=1 // pred_region
      _
    $region41: #{tpu_custom_call.1} parent=1 // pred_fallthru
      _
    // Predicated region
    $region42: #{tpu_custom_call.1} parent=1 // pred_check
      _
    $region43: #{tpu_custom_call.1} parent=1 // pred_check_branch
      %133 = sbr.rel (0) target = $region45
    $region44: #{tpu_custom_call.1} parent=1 // pred_region
      _
    $region45: #{tpu_custom_call.1} parent=1 // pred_fallthru
      _
    %134 = vsyncpa [#allocation5], 1

</llo_original>
